<compile_context>
chip_gen: v6e
topology: v6e:2x2x1
jax: 0.10.0
libtpu: 0.0.40
codegen_flags: <defaults>
</compile_context>

<pallas_src>
import functools

import jax
import jax.numpy as jnp
from jax.experimental import pallas as pl
from jax.experimental.pallas import tpu as pltpu


_MAX_TILE_BYTES = 8 * 1024 * 1024      # one spatial tile (per image slice)
_FUSED_VMEM_BUDGET = 40 * 1024 * 1024  # est. pipelined VMEM for the fused path
_VMEM_LIMIT = 48 * 1024 * 1024         # scoped VMEM limit (<= v7x 64 MiB phys)


# --------------------------------------------------------------------------
# Helper: lane-parallel partial sums (VPU adds over 128-lane slabs).
# --------------------------------------------------------------------------
def _accum_lane_slabs(x_ref, nslab):
    """Sum the (C, nslab*128) block of x_ref into a (C, 128) f32 value."""
    c = x_ref.shape[0]
    if nslab <= 8:  # short, static: unrolled adds
        acc = x_ref[:, 0:128].astype(jnp.float32)
        for k in range(1, nslab):
            acc = acc + x_ref[:, k * 128:(k + 1) * 128].astype(jnp.float32)
        return acc

    def body(k, acc):
        off = pl.multiple_of(k * 128, 128)
        return acc + x_ref[:, pl.ds(off, 128)].astype(jnp.float32)

    return jax.lax.fori_loop(0, nslab, body, jnp.zeros((c, 128), jnp.float32))


# --------------------------------------------------------------------------
# Fused fast path: single HBM read of x (pool + MLP + scale in one kernel).
# --------------------------------------------------------------------------
def _fused_kernel(x_ref, wd_ref, bd_ref, wu_ref, bu_ref, o_ref, acc_ref,
                  *, inv_hw, tile, n_tiles):
    # x_ref : (C, tile)      o_ref : (C, HW_pad)  -- resident across the tile axis
    # acc_ref: (C, 128) f32 lane-parallel pooled-sum accumulator
    t = pl.program_id(1)

    @pl.when(t == 0)
    def _():
        acc_ref[...] = jnp.zeros_like(acc_ref)

    # Cache the tile in the resident output block (this is the only HBM read).
    col0 = pl.multiple_of(t * tile, tile)
    o_ref[:, pl.ds(col0, tile)] = x_ref[...]

    # Lane-parallel pooled-sum accumulation (VPU adds, no per-tile XLU reduce).
    acc_ref[...] += _accum_lane_slabs(x_ref, tile // 128)

    @pl.when(t == n_tiles - 1)
    def _():
        pooled = jnp.sum(acc_ref[...], axis=1, keepdims=True) * inv_hw      # (C, 1)
        z = jnp.maximum(
            jnp.dot(wd_ref[...], pooled, preferred_element_type=jnp.float32)
            + bd_ref[...], 0.0)                                             # (Cs, 1)
        s = jax.nn.sigmoid(
            jnp.dot(wu_ref[...], z, preferred_element_type=jnp.float32)
            + bu_ref[...])                                                  # (C, 1)

        # Scale the cached image in place, one lane-dense slab at a time.
        def scale_body(k, carry):
            off = pl.multiple_of(k * tile, tile)
            blk = o_ref[:, pl.ds(off, tile)]
            o_ref[:, pl.ds(off, tile)] = (
                blk.astype(jnp.float32) * s).astype(o_ref.dtype)
            return carry

        jax.lax.fori_loop(0, n_tiles, scale_body, 0)


# --------------------------------------------------------------------------
# Streaming fallback, pass 1: lane-dense per-channel partial sums only.
# (MLP + sigmoid run in plain JAX on the tiny pooled tensor.)
# --------------------------------------------------------------------------
def _pool_kernel(x_ref, psum_ref, *, tile):
    # x_ref: (C, tile)   psum_ref: (C, 128) -- resident across the tile axis
    t = pl.program_id(2)

    @pl.when(t == 0)
    def _():
        psum_ref[...] = jnp.zeros_like(psum_ref)

    psum_ref[...] += _accum_lane_slabs(x_ref, tile // 128)


# --------------------------------------------------------------------------
# Streaming fallback, pass 2: per-channel scale (lane-dense elementwise).
# --------------------------------------------------------------------------
def _scale_kernel(x_ref, s_ref, o_ref):
    # x_ref: (C, tile)  s_ref: (C, 1) f32 -> broadcast along lanes
    o_ref[...] = (x_ref[...].astype(jnp.float32) * s_ref[...]).astype(o_ref.dtype)


# --------------------------------------------------------------------------
# Tiling helper (dtype-aware, budgets for pipelining headroom).
# --------------------------------------------------------------------------
def _auto_tile(hw_pad, c, itemsize, max_tile_bytes=_MAX_TILE_BYTES):
    """Largest lane-dense (multiple of 128) divisor of hw_pad within budget."""
    tile = 128
    while hw_pad % (tile * 2) == 0 and (tile * 2) * c * itemsize <= max_tile_bytes:
        tile *= 2
    return tile


# --------------------------------------------------------------------------
# Wrapper
# --------------------------------------------------------------------------
def channel_attention_pallas(x_nchw, params, *, spatial_tile=None,
                             force_two_pass=False):
    """x_nchw: (N, C, H, W).  params: (w_down, b_down, w_up, b_up)."""
    w_down, b_down, w_up, b_up = params
    N, C, H, W = x_nchw.shape
    Cs = w_down.shape[0]
    HW = H * W
    itemsize = jnp.dtype(x_nchw.dtype).itemsize

    # Free layout change: channels -> sublanes, spatial -> lanes (lane-dense).
    x = x_nchw.reshape(N, C, HW)
    HW_pad = ((HW + 127) // 128) * 128
    if HW_pad != HW:
        # TODO(synk): zero-padding materializes one extra copy of x; a masked
        # edge tile would avoid that extra traffic for unaligned H*W.
        x = jnp.pad(x, ((0, 0), (0, 0), (0, HW_pad - HW)))

    if spatial_tile is None:
        spatial_tile = _auto_tile(HW_pad, C, itemsize)
    assert HW_pad % spatial_tile == 0 and spatial_tile % 128 == 0
    T = HW_pad // spatial_tile

    image_bytes = C * HW_pad * itemsize
    tile_bytes = C * spatial_tile * itemsize
    weight_bytes = (Cs * C + C * Cs + Cs + C) * 4
    fused_vmem_est = 2 * image_bytes + 2 * tile_bytes + C * 128 * 4 + weight_bytes
    use_fused = (not force_two_pass) and fused_vmem_est <= _FUSED_VMEM_BUDGET

    if use_fused:
        # ---- single pallas_call, x read from HBM exactly once ----
        out = pl.pallas_call(
            functools.partial(_fused_kernel, inv_hw=1.0 / float(HW),
                              tile=spatial_tile, n_tiles=T),
            out_shape=jax.ShapeDtypeStruct((N, C, HW_pad), x.dtype),
            grid=(N, T),
            in_specs=[
                pl.BlockSpec((None, C, spatial_tile), lambda n, t: (n, 0, t)),  # x
                pl.BlockSpec((Cs, C), lambda n, t: (0, 0)),                     # w_down
                pl.BlockSpec((Cs, 1), lambda n, t: (0, 0)),                     # b_down
                pl.BlockSpec((C, Cs), lambda n, t: (0, 0)),                     # w_up
                pl.BlockSpec((C, 1), lambda n, t: (0, 0)),                      # b_up
            ],
            out_specs=pl.BlockSpec((None, C, HW_pad), lambda n, t: (n, 0, 0)),
            scratch_shapes=[pltpu.VMEM((C, 128), jnp.float32)],
            compiler_params=pltpu.CompilerParams(
                dimension_semantics=("parallel", "arbitrary"),
                vmem_limit_bytes=_VMEM_LIMIT),
        )(x, w_down, b_down, w_up, b_up)
    else:
        # ---- streaming fallback: two passes over HBM ----
        # Pass 1: pooled partial sums.  Optional P=2 partition of the reduction
        # so both v7x TensorCores work even at small batch.
        P = 2 if (T >= 2 and T % 2 == 0 and N < 4) else 1
        TP = T // P
        psum = pl.pallas_call(
            functools.partial(_pool_kernel, tile=spatial_tile),
            out_shape=jax.ShapeDtypeStruct((N, P, C, 128), jnp.float32),
            grid=(N, P, TP),
            in_specs=[pl.BlockSpec((None, C, spatial_tile),
                                   lambda n, p, t: (n, 0, p * TP + t))],
            out_specs=pl.BlockSpec((None, None, C, 128),
                                   lambda n, p, t: (n, p, 0, 0)),
            compiler_params=pltpu.CompilerParams(
                dimension_semantics=("parallel", "parallel", "arbitrary"),
                vmem_limit_bytes=_VMEM_LIMIT),
        )(x)

        # Tiny squeeze/excite MLP + sigmoid in plain JAX (few KFLOPs).
        pooled = psum.sum(axis=(1, 3)) * (1.0 / float(HW))        # (N, C)
        z = jax.nn.relu(pooled @ w_down.T + b_down[:, 0])         # (N, Cs)
        s = jax.nn.sigmoid(z @ w_up.T + b_up[:, 0])               # (N, C)
        scale = s[:, :, None].astype(jnp.float32)                 # (N, C, 1)

        # Pass 2: out = x * scale.
        out = pl.pallas_call(
            _scale_kernel,
            out_shape=jax.ShapeDtypeStruct((N, C, HW_pad), x.dtype),
            grid=(N, T),
            in_specs=[
                pl.BlockSpec((None, C, spatial_tile), lambda n, t: (n, 0, t)),
                pl.BlockSpec((None, C, 1), lambda n, t: (n, 0, 0)),
            ],
            out_specs=pl.BlockSpec((None, C, spatial_tile), lambda n, t: (n, 0, t)),
            compiler_params=pltpu.CompilerParams(
                dimension_semantics=("parallel", "parallel"),
                vmem_limit_bytes=_VMEM_LIMIT),
        )(x, scale)

    if HW_pad != HW:
        out = out[:, :, :HW]
    return out.reshape(N, C, H, W)


# --------------------------------------------------------------------------
# Pure-JAX reference + param init
# --------------------------------------------------------------------------
def channel_attention_reference(x_nchw, params):
    w_down, b_down, w_up, b_up = params
    pooled = jnp.mean(x_nchw, axis=(2, 3))                     # (N, C)
    z = jax.nn.relu(pooled @ w_down.T + b_down[:, 0])          # (N, Cs)
    s = jax.nn.sigmoid(z @ w_up.T + b_up[:, 0])                # (N, C)
    return x_nchw * s[:, :, None, None]


def init_params(key, num_feat, squeeze_factor):
    cs = num_feat // squeeze_factor
    ks = jax.random.split(key, 4)
    sc = 0.1
    w_down = sc * jax.random.normal(ks[0], (cs, num_feat), jnp.float32)
    b_down = sc * jax.random.normal(ks[1], (cs, 1), jnp.float32)
    w_up = sc * jax.random.normal(ks[2], (num_feat, cs), jnp.float32)
    b_up = sc * jax.random.normal(ks[3], (num_feat, 1), jnp.float32)
    return (w_down, b_down, w_up, b_up)


if __name__ == "__main__":
    key = jax.random.PRNGKey(0)
    k_x, k_p = jax.random.split(key)

    N, C, H, W = 2, 32, 16, 16
    squeeze_factor = 4

    x = jax.random.normal(k_x, (N, C, H, W), jnp.float32)
    params = init_params(k_p, C, squeeze_factor)

    ref = channel_attention_reference(x, params)

    # Fused single-read path, forced multi-tile (exercises accumulator +
    # in-place finalize loop).
    out_fused = jax.block_until_ready(
        channel_attention_pallas(x, params, spatial_tile=128))
    assert out_fused.shape == (N, C, H, W)
    assert jnp.allclose(out_fused, ref, atol=1e-5, rtol=1e-5), (
        float(jnp.max(jnp.abs(out_fused - ref))))

    # Fused single-read path, auto-tiled.
    out_auto = jax.block_until_ready(channel_attention_pallas(x, params))
    assert jnp.allclose(out_auto, ref, atol=1e-5, rtol=1e-5), (
        float(jnp.max(jnp.abs(out_auto - ref))))

    # Streaming two-pass fallback (forced), exercises the pooling + scale kernels.
    out_stream = jax.block_until_ready(
        channel_attention_pallas(x, params, spatial_tile=128, force_two_pass=True))
    assert jnp.allclose(out_stream, ref, atol=1e-5, rtol=1e-5), (
        float(jnp.max(jnp.abs(out_stream - ref))))

    print("KERNEL_OK")
</pallas_src>

<mosaic_0001>
module attributes {stable_mosaic.version = 11 : i64} {
  func.func @_fused_kernel(%arg0: i32, %arg1: i32, %arg2: memref<1x32x128xf32, #tpu.memory_space<vmem>>, %arg3: memref<8x32xf32, #tpu.memory_space<vmem>>, %arg4: memref<8x1xf32, #tpu.memory_space<vmem>>, %arg5: memref<32x8xf32, #tpu.memory_space<vmem>>, %arg6: memref<32x1xf32, #tpu.memory_space<vmem>>, %arg7: memref<1x32x256xf32, #tpu.memory_space<vmem>>, %arg8: memref<32x128xf32, #tpu.memory_space<vmem>>) attributes {dimension_semantics = [#tpu.dimension_semantics<parallel>, #tpu.dimension_semantics<arbitrary>], iteration_bounds = array<i64: 2, 2>, scalar_prefetch = 0 : i64, scratch_operands = 1 : i64, tpu.core_type = #tpu.core_type<tc>, window_params = [{transform_indices = @transform_0, window_bounds = array<i64: 1, 32, 128>}, {pipeline_mode = #tpu.pipeline_mode<synchronous>, transform_indices = @transform_1, window_bounds = array<i64: 8, 32>}, {pipeline_mode = #tpu.pipeline_mode<synchronous>, transform_indices = @transform_2, window_bounds = array<i64: 8, 1>}, {pipeline_mode = #tpu.pipeline_mode<synchronous>, transform_indices = @transform_3, window_bounds = array<i64: 32, 8>}, {pipeline_mode = #tpu.pipeline_mode<synchronous>, transform_indices = @transform_4, window_bounds = array<i64: 32, 1>}, {transform_indices = @transform_5, window_bounds = array<i64: 1, 32, 256>}]} {
    %c0_i32 = arith.constant 0 : i32
    %0 = arith.cmpi eq, %arg1, %c0_i32 : i32
    %1 = arith.extui %0 : i1 to i32
    %c0_i32_0 = arith.constant 0 : i32
    %2 = arith.cmpi ne, %1, %c0_i32_0 : i32
    scf.if %2 {
      %cst = arith.constant 0.000000e+00 : f32
      %19 = vector.broadcast %cst : f32 to vector<32x128xf32>
      %c0_13 = arith.constant 0 : index
      %c0_14 = arith.constant 0 : index
      %20 = vector.load %arg8[%c0_13, %c0_14] : memref<32x128xf32, #tpu.memory_space<vmem>>, vector<32x128xf32>
      tpu.vector_store %arg8[%c0_13, %c0_14], %19 {strides = array<i32>} : memref<32x128xf32, #tpu.memory_space<vmem>>, vector<32x128xf32>,
    } else {
    }
    %c128_i32 = arith.constant 128 : i32
    %3 = arith.muli %arg1, %c128_i32 : i32
    %4 = tpu.assume_multiple %3, 128 : i32
    %c0 = arith.constant 0 : index
    %c0_1 = arith.constant 0 : index
    %c0_2 = arith.constant 0 : index
    %5 = vector.load %arg2[%c0, %c0_1, %c0_2] : memref<1x32x128xf32, #tpu.memory_space<vmem>>, vector<1x32x128xf32>
    %6 = vector.shape_cast %5 : vector<1x32x128xf32> to vector<32x128xf32>
    %c0_3 = arith.constant 0 : index
    %c0_4 = arith.constant 0 : index
    %7 = arith.index_cast %4 : i32 to index
    %8 = vector.load %arg7[%c0_3, %c0_4, %7] : memref<1x32x256xf32, #tpu.memory_space<vmem>>, vector<1x32x128xf32>
    %9 = vector.shape_cast %8 : vector<1x32x128xf32> to vector<32x128xf32>
    %10 = vector.shape_cast %6 : vector<32x128xf32> to vector<1x32x128xf32>
    tpu.vector_store %arg7[%c0_3, %c0_4, %7], %10 {strides = array<i32>} : memref<1x32x256xf32, #tpu.memory_space<vmem>>, vector<1x32x128xf32>,
    %c0_5 = arith.constant 0 : index
    %c0_6 = arith.constant 0 : index
    %11 = vector.load %arg8[%c0_5, %c0_6] : memref<32x128xf32, #tpu.memory_space<vmem>>, vector<32x128xf32>
    %c0_7 = arith.constant 0 : index
    %c0_8 = arith.constant 0 : index
    %c0_9 = arith.constant 0 : index
    %12 = vector.load %arg2[%c0_7, %c0_8, %c0_9] : memref<1x32x128xf32, #tpu.memory_space<vmem>>, vector<1x32x128xf32>
    %13 = vector.shape_cast %12 : vector<1x32x128xf32> to vector<32x128xf32>
    %14 = arith.addf %11, %13 : vector<32x128xf32>
    %c0_10 = arith.constant 0 : index
    %c0_11 = arith.constant 0 : index
    %15 = vector.load %arg8[%c0_10, %c0_11] : memref<32x128xf32, #tpu.memory_space<vmem>>, vector<32x128xf32>
    tpu.vector_store %arg8[%c0_10, %c0_11], %14 {strides = array<i32>} : memref<32x128xf32, #tpu.memory_space<vmem>>, vector<32x128xf32>,
    %c1_i32 = arith.constant 1 : i32
    %16 = arith.cmpi eq, %arg1, %c1_i32 : i32
    %17 = arith.extui %16 : i1 to i32
    %c0_i32_12 = arith.constant 0 : i32
    %18 = arith.cmpi ne, %17, %c0_i32_12 : i32
    scf.if %18 {
      %c0_13 = arith.constant 0 : index
      %c0_14 = arith.constant 0 : index
      %19 = vector.load %arg8[%c0_13, %c0_14] : memref<32x128xf32, #tpu.memory_space<vmem>>, vector<32x128xf32>
      %cst = arith.constant dense<0.000000e+00> : vector<32xf32>
      %20 = vector.multi_reduction <add>, %19, %cst [1] : vector<32x128xf32> to vector<32xf32>
      %21 = vector.shape_cast %20 : vector<32xf32> to vector<32x1xf32>
      %cst_15 = arith.constant 3.906250e-03 : f32
      %22 = vector.broadcast %cst_15 : f32 to vector<32x1xf32>
      %23 = arith.mulf %21, %22 : vector<32x1xf32>
      %c0_16 = arith.constant 0 : index
      %c0_17 = arith.constant 0 : index
      %24 = vector.load %arg3[%c0_16, %c0_17] : memref<8x32xf32, #tpu.memory_space<vmem>>, vector<8x32xf32>
      %cst_18 = arith.constant dense<0.000000e+00> : vector<8x1xf32>
      %25 = tpu.matmul %24, %23, %cst_18 {dimension_numbers = #tpu.dot_dimension_numbers<[1], [0], [0], [1], [0, 0, 1, 1], [], []>} : vector<8x32xf32>, vector<32x1xf32>, vector<8x1xf32> -> vector<8x1xf32>
      %c0_19 = arith.constant 0 : index
      %c0_20 = arith.constant 0 : index
      %26 = vector.load %arg4[%c0_19, %c0_20] : memref<8x1xf32, #tpu.memory_space<vmem>>, vector<8x1xf32>
      %27 = arith.addf %25, %26 : vector<8x1xf32>
      %cst_21 = arith.constant 0.000000e+00 : f32
      %28 = vector.broadcast %cst_21 : f32 to vector<8x1xf32>
      %29 = arith.maximumf %27, %28 : vector<8x1xf32>
      %c0_22 = arith.constant 0 : index
      %c0_23 = arith.constant 0 : index
      %30 = vector.load %arg5[%c0_22, %c0_23] : memref<32x8xf32, #tpu.memory_space<vmem>>, vector<32x8xf32>
      %cst_24 = arith.constant dense<0.000000e+00> : vector<32x1xf32>
      %31 = tpu.matmul %30, %29, %cst_24 {dimension_numbers = #tpu.dot_dimension_numbers<[1], [0], [0], [1], [0, 0, 1, 1], [], []>} : vector<32x8xf32>, vector<8x1xf32>, vector<32x1xf32> -> vector<32x1xf32>
      %c0_25 = arith.constant 0 : index
      %c0_26 = arith.constant 0 : index
      %32 = vector.load %arg6[%c0_25, %c0_26] : memref<32x1xf32, #tpu.memory_space<vmem>>, vector<32x1xf32>
      %33 = arith.addf %31, %32 : vector<32x1xf32>
      %34 = arith.negf %33 : vector<32x1xf32>
      %35 = math.exp %34 : vector<32x1xf32>
      %cst_27 = arith.constant 1.000000e+00 : f32
      %36 = vector.broadcast %cst_27 : f32 to vector<32x1xf32>
      %37 = arith.addf %36, %35 : vector<32x1xf32>
      %38 = arith.divf %36, %37 : vector<32x1xf32>
      %c0_i32_28 = arith.constant 0 : i32
      %c2_i32 = arith.constant 2 : i32
      %39 = arith.addi %c0_i32_28, %c2_i32 : i32
      %c1_i32_29 = arith.constant 1 : i32
      scf.for %arg9 = %c0_i32_28 to %39 step %c1_i32_29  : i32 {
        %c128_i32_31 = arith.constant 128 : i32
        %40 = arith.muli %arg9, %c128_i32_31 : i32
        %41 = tpu.assume_multiple %40, 128 : i32
        %c0_32 = arith.constant 0 : index
        %c0_33 = arith.constant 0 : index
        %42 = arith.index_cast %41 : i32 to index
        %43 = vector.load %arg7[%c0_32, %c0_33, %42] : memref<1x32x256xf32, #tpu.memory_space<vmem>>, vector<1x32x128xf32>
        %44 = vector.shape_cast %43 : vector<1x32x128xf32> to vector<32x128xf32>
        %45 = vector.broadcast %38 : vector<32x1xf32> to vector<32x128xf32>
        %46 = arith.mulf %44, %45 : vector<32x128xf32>
        %c0_34 = arith.constant 0 : index
        %c0_35 = arith.constant 0 : index
        %47 = arith.index_cast %41 : i32 to index
        %48 = vector.load %arg7[%c0_34, %c0_35, %47] : memref<1x32x256xf32, #tpu.memory_space<vmem>>, vector<1x32x128xf32>
        %49 = vector.shape_cast %48 : vector<1x32x128xf32> to vector<32x128xf32>
        %50 = vector.shape_cast %46 : vector<32x128xf32> to vector<1x32x128xf32>
        tpu.vector_store %arg7[%c0_34, %c0_35, %47], %50 {strides = array<i32>} : memref<1x32x256xf32, #tpu.memory_space<vmem>>, vector<1x32x128xf32>,
      }
      %c2_i32_30 = arith.constant 2 : i32
    } else {
    }
    return
  }
  func.func @transform_0(%arg0: i32, %arg1: i32) -> (i32, i32, i32) {
    %c0_i32 = arith.constant 0 : i32
    %c0_i32_0 = arith.constant 0 : i32
    return %arg0, %c0_i32, %arg1 : i32, i32, i32
  }
  func.func @transform_1(%arg0: i32, %arg1: i32) -> (i32, i32) {
    %c0_i32 = arith.constant 0 : i32
    %c0_i32_0 = arith.constant 0 : i32
    %c0_i32_1 = arith.constant 0 : i32
    return %c0_i32, %c0_i32_0 : i32, i32
  }
  func.func @transform_2(%arg0: i32, %arg1: i32) -> (i32, i32) {
    %c0_i32 = arith.constant 0 : i32
    %c0_i32_0 = arith.constant 0 : i32
    %c0_i32_1 = arith.constant 0 : i32
    return %c0_i32, %c0_i32_0 : i32, i32
  }
  func.func @transform_3(%arg0: i32, %arg1: i32) -> (i32, i32) {
    %c0_i32 = arith.constant 0 : i32
    %c0_i32_0 = arith.constant 0 : i32
    %c0_i32_1 = arith.constant 0 : i32
    return %c0_i32, %c0_i32_0 : i32, i32
  }
  func.func @transform_4(%arg0: i32, %arg1: i32) -> (i32, i32) {
    %c0_i32 = arith.constant 0 : i32
    %c0_i32_0 = arith.constant 0 : i32
    %c0_i32_1 = arith.constant 0 : i32
    return %c0_i32, %c0_i32_0 : i32, i32
  }
  func.func @transform_5(%arg0: i32, %arg1: i32) -> (i32, i32, i32) {
    %c0_i32 = arith.constant 0 : i32
    %c0_i32_0 = arith.constant 0 : i32
    %c0_i32_1 = arith.constant 0 : i32
    return %arg0, %c0_i32, %c0_i32_0 : i32, i32, i32
  }
}

</mosaic_0001>

<llo_original>
// kernel: tpu_custom_call.1
$region0: #{tpu_custom_call.1}
  #allocation0 [shape = 'u32[]', space=smem, size = 0x4, offset = 0x4, fixed_abs, tag = 'smem constant byte address 0x4 - core index']
  #allocation1 [shape = 'u32[144,128]{1,0:T(1,128)}', space=vmem, size = 0x12000, scoped, tag = 'internal scratch']
  #allocation2 [shape = 'f32[32,128]{1,0:T(8,128)}', space=vmem, size = 0x4000, scoped, tag = 'scratch operand']
  %s0 = inlined_call_operand.hbm [shape: f32[2,32,256], index: 0, kind: input, shape index: {}]
  %s1 = inlined_call_operand.vmem [shape: f32[8,32], index: 1, kind: input, shape index: {}]
  %s2 = inlined_call_operand.vmem [shape: f32[8,1], index: 2, kind: input, shape index: {}]
  %s3 = inlined_call_operand.vmem [shape: f32[32,8], index: 3, kind: input, shape index: {}]
  %s4 = inlined_call_operand.vmem [shape: f32[32,1], index: 4, kind: input, shape index: {}]
  %s5 = inlined_call_operand.hbm [shape: f32[2,32,256], index: 5, kind: output, shape index: {}]
  %s6 = sld [smem:[#allocation0]]
  $region72: #{tpu_custom_call.1} parent=0
    _
  %s8 = ssub.s32 1, %s6
  %s9 = scalar_select 0, %s8, %s6
  $region1: #{tpu_custom_call.1} parent=0
    #allocation3 [shape = 'u8[32768]{0}', space=vmem, size = 0x8000, scoped, tag = 'input window, operand 0']
    #allocation4 [shape = 's32[2]{0}', space=sflag, size = 0x8, scoped, tag = 'scoped memory for tpu_custom_call.1']
    #allocation5 [shape = 's32[2]{0}', space=sflag, size = 0x8, scoped, tag = 'scoped memory for tpu_custom_call.1']
    #allocation6 [shape = 'u8[65536]{0}', space=vmem, size = 0x10000, scoped, tag = 'output window, operand 0']
    %10 = vsyncpa [#allocation4], 0
    %s11 = scalar_lea.sflag [#allocation4], 1
    %12 = vsyncpa %s11, 0
    %13 = vsyncpa [#allocation5], 0
    %s14 = scalar_lea.sflag [#allocation5], 1
    %15 = vsyncpa %s14, 0
    loop: start=0, step=1, limit=6
    $region2: #{tpu_custom_call.1} parent=1 // loop_pre_header
      _
    $region3: #{tpu_custom_call.1} parent=1 // loop_header
      %s17 = sphi 0, %s21
      %p18 = scmp.ge.s32.totalorder %s17, 6
      %s24 = sphi 0, %s36
      %s25 = sphi 0, %s32
      %s26 = sphi 0, %s24
      %s27 = sphi 0, %s25
      %s28 = sphi 0, %s26
      %s29 = sphi 0, %s27
      %s41 = sphi 0, %s43
      %s44 = sphi 0, %s41
      %s45 = sphi 0, %s44
      %s61 = sphi 0, %s45
      %s65 = sphi 0, %s65
      %s67 = sphi 0, %s65
      %s68 = sphi 0, %s67
      %s82 = sphi 0, %s68
      %s86 = sphi 0, %s86
      %s88 = sphi 0, %s86
      %s89 = sphi 0, %s88
      %s103 = sphi 0, %s89
      %s107 = sphi 0, %s107
      %s109 = sphi 0, %s107
      %s110 = sphi 0, %s109
      %s124 = sphi 0, %s110
      %s128 = sphi 0, %s128
      %s130 = sphi 0, %s128
      %s131 = sphi 0, %s130
      %s145 = sphi 0, %s131
      %s151 = sphi 0, %s153
      %s154 = sphi 0, %s151
      %s155 = sphi 0, %s154
      %s171 = sphi 0, %s155
    $region4: #{tpu_custom_call.1} parent=1 // loop_header_branch
      %20 = sbr.rel (%p18) target = $region8
    $region5: #{tpu_custom_call.1} parent=1 // loop_body
      %s22 = ssub.s32 %s17, 1
      %s23 = ssub.s32 %s17, 2
      %s30 = sadd.s32 1, %s25
      %p31 = scmp.ge.s32.totalorder %s30, 2
      %s32 = scalar_select %p31, 0, %s30
      %s33 = sadd.s32 1, %s24
      %s34 = scalar_select %p31, %s33, %s24
      %p35 = scmp.ge.s32.totalorder %s34, 2
      %s36 = scalar_select %p35, 0, %s34
      %s37 = ssub.s32 %s24, %s36
      %s38 = ssub.s32 %s25, %s32
      %s39 = sor.u32 %s37, %s38
      %p40 = scmp.eq.s32.totalorder %s39, 0
      %s42 = sadd.s32 %s41, 1
      %s43 = scalar_select %p40, %s41, %s42
      %p46 = pneg %p40
      %p47 = scmp.eq.s32.totalorder %s17, 3
      %p48 = por %p46, %p47
      %p49 = scmp.ne.s32.totalorder %s41, %s44
      %p50 = scmp.eq.s32.totalorder %s17, 0
      %p51 = por %p49, %p50
      %p52 = scmp.ne.s32.totalorder %s41, %s44
      %p53 = scmp.eq.s32.totalorder %s22, 3
      %p54 = por %p52, %p53
      %p55 = scmp.ne.s32.totalorder %s44, %s45
      %p56 = scmp.eq.s32.totalorder %s22, 0
      %p57 = por %p55, %p56
      %p58 = scmp.ne.s32.totalorder %s44, %s45
      %p59 = scmp.eq.s32.totalorder %s23, 3
      %p60 = por %p58, %p59
      %p62 = scmp.ne.s32.totalorder %s45, %s61
      %p63 = scmp.eq.s32.totalorder %s23, 0
      %p64 = por %p62, %p63
      %s66 = sadd.s32 %s65, 1
      %p69 = scmp.eq.s32.totalorder %s17, 3
      %p70 = scmp.ne.s32.totalorder %s65, %s67
      %p71 = scmp.eq.s32.totalorder %s17, 0
      %p72 = por %p70, %p71
      %p73 = scmp.ne.s32.totalorder %s65, %s67
      %p74 = scmp.eq.s32.totalorder %s22, 3
      %p75 = por %p73, %p74
      %p76 = scmp.ne.s32.totalorder %s67, %s68
      %p77 = scmp.eq.s32.totalorder %s22, 0
      %p78 = por %p76, %p77
      %p79 = scmp.ne.s32.totalorder %s67, %s68
      %p80 = scmp.eq.s32.totalorder %s23, 3
      %p81 = por %p79, %p80
      %p83 = scmp.ne.s32.totalorder %s68, %s82
      %p84 = scmp.eq.s32.totalorder %s23, 0
      %p85 = por %p83, %p84
      %s87 = sadd.s32 %s86, 1
      %p90 = scmp.eq.s32.totalorder %s17, 3
      %p91 = scmp.ne.s32.totalorder %s86, %s88
      %p92 = scmp.eq.s32.totalorder %s17, 0
      %p93 = por %p91, %p92
      %p94 = scmp.ne.s32.totalorder %s86, %s88
      %p95 = scmp.eq.s32.totalorder %s22, 3
      %p96 = por %p94, %p95
      %p97 = scmp.ne.s32.totalorder %s88, %s89
      %p98 = scmp.eq.s32.totalorder %s22, 0
      %p99 = por %p97, %p98
      %p100 = scmp.ne.s32.totalorder %s88, %s89
      %p101 = scmp.eq.s32.totalorder %s23, 3
      %p102 = por %p100, %p101
      %p104 = scmp.ne.s32.totalorder %s89, %s103
      %p105 = scmp.eq.s32.totalorder %s23, 0
      %p106 = por %p104, %p105
      %s108 = sadd.s32 %s107, 1
      %p111 = scmp.eq.s32.totalorder %s17, 3
      %p112 = scmp.ne.s32.totalorder %s107, %s109
      %p113 = scmp.eq.s32.totalorder %s17, 0
      %p114 = por %p112, %p113
      %p115 = scmp.ne.s32.totalorder %s107, %s109
      %p116 = scmp.eq.s32.totalorder %s22, 3
      %p117 = por %p115, %p116
      %p118 = scmp.ne.s32.totalorder %s109, %s110
      %p119 = scmp.eq.s32.totalorder %s22, 0
      %p120 = por %p118, %p119
      %p121 = scmp.ne.s32.totalorder %s109, %s110
      %p122 = scmp.eq.s32.totalorder %s23, 3
      %p123 = por %p121, %p122
      %p125 = scmp.ne.s32.totalorder %s110, %s124
      %p126 = scmp.eq.s32.totalorder %s23, 0
      %p127 = por %p125, %p126
      %s129 = sadd.s32 %s128, 1
      %p132 = scmp.eq.s32.totalorder %s17, 3
      %p133 = scmp.ne.s32.totalorder %s128, %s130
      %p134 = scmp.eq.s32.totalorder %s17, 0
      %p135 = por %p133, %p134
      %p136 = scmp.ne.s32.totalorder %s128, %s130
      %p137 = scmp.eq.s32.totalorder %s22, 3
      %p138 = por %p136, %p137
      %p139 = scmp.ne.s32.totalorder %s130, %s131
      %p140 = scmp.eq.s32.totalorder %s22, 0
      %p141 = por %p139, %p140
      %p142 = scmp.ne.s32.totalorder %s130, %s131
      %p143 = scmp.eq.s32.totalorder %s23, 3
      %p144 = por %p142, %p143
      %p146 = scmp.ne.s32.totalorder %s131, %s145
      %p147 = scmp.eq.s32.totalorder %s23, 0
      %p148 = por %p146, %p147
      %s149 = ssub.s32 %s24, %s36
      %p150 = scmp.eq.s32.totalorder %s149, 0
      %s152 = sadd.s32 %s151, 1
      %s153 = scalar_select %p150, %s151, %s152
      %p156 = pneg %p150
      %p157 = scmp.eq.s32.totalorder %s17, 3
      %p158 = por %p156, %p157
      %p159 = scmp.ne.s32.totalorder %s151, %s154
      %p160 = scmp.eq.s32.totalorder %s17, 0
      %p161 = por %p159, %p160
      %p162 = scmp.ne.s32.totalorder %s151, %s154
      %p163 = scmp.eq.s32.totalorder %s22, 3
      %p164 = por %p162, %p163
      %p165 = scmp.ne.s32.totalorder %s154, %s155
      %p166 = scmp.eq.s32.totalorder %s22, 0
      %p167 = por %p165, %p166
      %p168 = scmp.ne.s32.totalorder %s154, %s155
      %p169 = scmp.eq.s32.totalorder %s23, 3
      %p170 = por %p168, %p169
      %p172 = scmp.ne.s32.totalorder %s155, %s171
      %p173 = scmp.eq.s32.totalorder %s23, 0
      %p174 = por %p172, %p173
      %p175 = scmp.le.s32.totalorder 1, %s17
      %p176 = scmp.lt.s32.totalorder %s17, 5
      %p177 = pnand %p175, %p176
      %p178 = pneg %p177
      // Predicated region
      $region9: #{tpu_custom_call.1} parent=5 // pred_check
        _
      $region10: #{tpu_custom_call.1} parent=5 // pred_check_branch
        %180 = sbr.rel (%p177) target = $region12
      $region11: #{tpu_custom_call.1} parent=5 // pred_region
        %s181 = ssub.s32 %s17, 1
        // Predicated region
        $region13: #{tpu_custom_call.1} parent=11 // pred_check
          %p182 = pneg %p78
        $region14: #{tpu_custom_call.1} parent=11 // pred_check_branch
          %184 = sbr.rel (%p182) target = $region16
        $region15: #{tpu_custom_call.1} parent=11 // pred_region
          _
        $region16: #{tpu_custom_call.1} parent=11 // pred_fallthru
          _
        // Predicated region
        $region17: #{tpu_custom_call.1} parent=11 // pred_check
          %p185 = pneg %p99
        $region18: #{tpu_custom_call.1} parent=11 // pred_check_branch
          %187 = sbr.rel (%p185) target = $region20
        $region19: #{tpu_custom_call.1} parent=11 // pred_region
          _
        $region20: #{tpu_custom_call.1} parent=11 // pred_fallthru
          _
        // Predicated region
        $region21: #{tpu_custom_call.1} parent=11 // pred_check
          %p188 = pneg %p120
        $region22: #{tpu_custom_call.1} parent=11 // pred_check_branch
          %190 = sbr.rel (%p188) target = $region24
        $region23: #{tpu_custom_call.1} parent=11 // pred_region
          _
        $region24: #{tpu_custom_call.1} parent=11 // pred_fallthru
          _
        // Predicated region
        $region25: #{tpu_custom_call.1} parent=11 // pred_check
          %p191 = pneg %p141
        $region26: #{tpu_custom_call.1} parent=11 // pred_check_branch
          %193 = sbr.rel (%p191) target = $region28
        $region27: #{tpu_custom_call.1} parent=11 // pred_region
          _
        $region28: #{tpu_custom_call.1} parent=11 // pred_fallthru
          _
      $region12: #{tpu_custom_call.1} parent=5 // pred_fallthru
        _
      %p194 = scmp.lt.s32.totalorder %s17, 4
      // Predicated region
      $region29: #{tpu_custom_call.1} parent=5 // pred_check
        %p195 = pneg %p194
      $region30: #{tpu_custom_call.1} parent=5 // pred_check_branch
        %197 = sbr.rel (%p195) target = $region32
      $region31: #{tpu_custom_call.1} parent=5 // pred_region
        // Predicated region
        $region33: #{tpu_custom_call.1} parent=31 // pred_check
          %p198 = pneg %p51
        $region34: #{tpu_custom_call.1} parent=31 // pred_check_branch
          %200 = sbr.rel (%p198) target = $region36
        $region35: #{tpu_custom_call.1} parent=31 // pred_region
          %s201 = sand.u32 %s41, 1
          %s202 = scalar_lea.sflag [#allocation4], %s201
          %s203 = sand.u32 %s41, 1
          %s204 = smul.addr %s203, 32
          %s205 = scalar_lea.vmem [#allocation3], %s204
          %s207 = ssub.s32 512, 512
          %208 = vsyncadd %s202, %s207
          %s209 = smul.addr %s24, 8
          %s210 = sadd.s32 %s25, %s209
          %s211 = smul.addr %s210, 128
          %s212 = scalar_lea.hbm %s0, %s211
          %s213 = sshll.u32 %s205, 4
          %s214 = int_to_ptr.vmem [resolvable:$true] %s213
          %219 = dma.hbm_to_vmem [thread:$0]  %s212, 512, %s214, %s202, 256, 128, 8
        $region36: #{tpu_custom_call.1} parent=31 // pred_fallthru
          _
      $region32: #{tpu_custom_call.1} parent=5 // pred_fallthru
        _
      %p220 = scmp.le.s32.totalorder 1, %s17
      %p221 = scmp.lt.s32.totalorder %s17, 5
      %p222 = pnand %p220, %p221
      %p223 = pneg %p222
      // Predicated region
      $region37: #{tpu_custom_call.1} parent=5 // pred_check
        _
      $region38: #{tpu_custom_call.1} parent=5 // pred_check_branch
        %225 = sbr.rel (%p222) target = $region40
      $region39: #{tpu_custom_call.1} parent=5 // pred_region
        %s226 = ssub.s32 %s17, 1
        %s227 = sand.u32 %s44, 1
        %s228 = scalar_lea.sflag [#allocation4], %s227
        %s229 = sand.u32 %s44, 1
        %s230 = smul.addr %s229, 32
        %s231 = scalar_lea.vmem [#allocation3], %s230
        // Predicated region
        $region41: #{tpu_custom_call.1} parent=39 // pred_check
          %p232 = pneg %p57
        $region42: #{tpu_custom_call.1} parent=39 // pred_check_branch
          %234 = sbr.rel (%p232) target = $region44
        $region43: #{tpu_custom_call.1} parent=39 // pred_region
          %235 = dma.done %s228, 512
        $region44: #{tpu_custom_call.1} parent=39 // pred_fallthru
          _
        %s236 = sand.u32 %s44, 1
        %s237 = scalar_lea.sflag [#allocation4], %s236
        %s238 = sand.u32 %s44, 1
        %s239 = smul.addr %s238, 32
        %s240 = scalar_lea.vmem [#allocation3], %s239
        %p241 = pneg %p57
        %p242 = pneg %p54
        %p243 = pneg %p78
        %p244 = pneg %p75
        %p245 = pneg %p99
        %p246 = pneg %p96
        %p247 = pneg %p120
        %p248 = pneg %p117
        %p249 = pneg %p141
        %p250 = pneg %p138
        %p251 = pneg %p167
        %p252 = pneg %p164
        %s253 = sand.u32 %s154, 1
        %s254 = scalar_lea.sflag [#allocation5], %s253
        %s255 = sand.u32 %s154, 1
        %s256 = smul.addr %s255, 64
        %s257 = scalar_lea.vmem [#allocation6], %s256
        %p258 = scmp.eq.s32.totalorder %s27, 0
        // Predicated region
        $region45: #{tpu_custom_call.1} parent=39 // pred_check
          %p259 = pneg %p258
        $region46: #{tpu_custom_call.1} parent=39 // pred_check_branch
          %261 = sbr.rel (%p259) target = $region48
        $region47: #{tpu_custom_call.1} parent=39 // pred_region
          %262 = vst [vmem:[#allocation2] sm:$0xff] 0.0
          %263 = vst [vmem:[#allocation2 + $0x8] sm:$0xff] 0.0
          %264 = vst [vmem:[#allocation2 + $0x10] sm:$0xff] 0.0
          %265 = vst [vmem:[#allocation2 + $0x18] sm:$0xff] 0.0
        $region48: #{tpu_custom_call.1} parent=39 // pred_fallthru
          _
        %s266 = smul.u32 %s27, 128
        %v267 = vld [vmem:[%s231] sm:$0xff]
        %v268 = vld [vmem:[%s231 + $0x8] sm:$0xff]
        %v269 = vld [vmem:[%s231 + $0x10] sm:$0xff]
        %v270 = vld [vmem:[%s231 + $0x18] sm:$0xff]
        %s271 = sshra.s32 %s266, 7
        %s272 = sand.u32 %s266, 127
        %s273 = smul.addr %s271, 8
        %s274 = scalar_lea.vmem %s257, %s273 [#allocation6]
        %275 = vst [vmem:[%s274] sm:$0xff] %v267
        %276 = vst [vmem:[%s274 + $0x10] sm:$0xff] %v268
        %277 = vst [vmem:[%s274 + $0x20] sm:$0xff] %v269
        %278 = vst [vmem:[%s274 + $0x30] sm:$0xff] %v270
        %v279 = vld [vmem:[#allocation2] sm:$0xff]
        %v280 = vld [vmem:[#allocation2 + $0x8] sm:$0xff]
        %v281 = vld [vmem:[#allocation2 + $0x10] sm:$0xff]
        %v282 = vld [vmem:[#allocation2 + $0x18] sm:$0xff]
        %v283 = vld [vmem:[%s231] sm:$0xff]
        %v284 = vld [vmem:[%s231 + $0x8] sm:$0xff]
        %v285 = vld [vmem:[%s231 + $0x10] sm:$0xff]
        %v286 = vld [vmem:[%s231 + $0x18] sm:$0xff]
        %v287 = vadd.f32 %v279, %v283
        %v288 = vadd.f32 %v280, %v284
        %v289 = vadd.f32 %v281, %v285
        %v290 = vadd.f32 %v282, %v286
        %291 = vst [vmem:[#allocation2] sm:$0xff] %v287
        %292 = vst [vmem:[#allocation2 + $0x8] sm:$0xff] %v288
        %293 = vst [vmem:[#allocation2 + $0x10] sm:$0xff] %v289
        %294 = vst [vmem:[#allocation2 + $0x18] sm:$0xff] %v290
        %p295 = scmp.eq.s32.totalorder %s27, 1
        // Predicated region
        $region49: #{tpu_custom_call.1} parent=39 // pred_check
          %p296 = pneg %p295
        $region50: #{tpu_custom_call.1} parent=39 // pred_check_branch
          %298 = sbr.rel (%p296) target = $region52
        $region51: #{tpu_custom_call.1} parent=39 // pred_region
          %v299 = vld [vmem:[#allocation2] sm:$0xff]
          %v300 = vld [vmem:[#allocation2 + $0x8] sm:$0xff]
          %v301 = vld [vmem:[#allocation2 + $0x10] sm:$0xff]
          %v302 = vld [vmem:[#allocation2 + $0x18] sm:$0xff]
          %303 = vadd.xlane.f32.xlu0 %v299
          %v304 = vpop.xlane.xlu0 %303
          %305 = vadd.xlane.f32.xlu0 %v300
          %v306 = vpop.xlane.xlu0 %305
          %307 = vadd.xlane.f32.xlu0 %v301
          %v308 = vpop.xlane.xlu0 %307
          %309 = vadd.xlane.f32.xlu0 %v302
          %v310 = vpop.xlane.xlu0 %309
          %v311 = vmul.f32 %v304, 0.00390625
          %v312 = vmul.f32 %v306, 0.00390625
          %v313 = vmul.f32 %v308, 0.00390625
          %v314 = vmul.f32 %v310, 0.00390625
          %v315 = vld [vmem:[%s1] sm:$0xff]
          %v316 = vld [vmem:[%s2] sm:$0xff]
          %vm317 = vcmask 261120
          %v319 = vsel %vm317, %v315, 0
          %321 = vmatprep.subr.mxu0 0.0
          %322 = vmatpush1.msra.mxu0 0.0
          %323 = vmatprep.subr.mxu0 0.0
          %324 = vmatpush1.msra.mxu0 0.0
          %325 = vmatprep.subr.mxu0 0.0
          %326 = vmatpush1.msra.mxu0 0.0
          %327 = vmatprep.subr.mxu0 0.0
          %328 = vmatpush1.msra.mxu0 0.0
          %329 = vmatprep.subr.mxu0 0.0
          %330 = vmatpush1.msra.mxu0 0.0
          %331 = vmatprep.subr.mxu0 0.0
          %332 = vmatpush1.msra.mxu0 0.0
          %333 = vmatprep.subr.mxu0 0.0
          %334 = vmatpush1.msra.mxu0 0.0
          %335 = vmatprep.subr.mxu0 0.0
          %336 = vmatpush1.msra.mxu0 0.0
          %337 = vmatprep.subr.mxu0 0.0
          %338 = vmatpush1.msra.mxu0 0.0
          %339 = vmatprep.subr.mxu0 0.0
          %340 = vmatpush1.msra.mxu0 0.0
          %341 = vmatprep.subr.mxu0 0.0
          %342 = vmatpush1.msra.mxu0 0.0
          %343 = vmatprep.subr.mxu0 0.0
          %344 = vmatpush1.msra.mxu0 0.0
          %345 = vmatprep.subr.mxu0 0.0
          %346 = vmatpush1.msra.mxu0 %v314
          %347 = vmatprep.subr.mxu0 0.0
          %348 = vmatpush1.msra.mxu0 %v313
          %349 = vmatprep.subr.mxu0 0.0
          %350 = vmatpush1.msra.mxu0 %v312
          %351 = vmatprep.subr.mxu0 0.0
          %352 = vmatpush1.msra.mxu0 %v311
          %353 = vmatprep.subr.mxu0 0.0
          %354 = vmatpush2.msra.mxu0 0.0
          %355 = vmatprep.subr.mxu0 0.0
          %356 = vmatpush2.msra.mxu0 0.0
          %357 = vmatprep.subr.mxu0 0.0
          %358 = vmatpush2.msra.mxu0 0.0
          %359 = vmatprep.subr.mxu0 0.0
          %360 = vmatpush2.msra.mxu0 0.0
          %361 = vmatprep.subr.mxu0 0.0
          %362 = vmatpush2.msra.mxu0 0.0
          %363 = vmatprep.subr.mxu0 0.0
          %364 = vmatpush2.msra.mxu0 0.0
          %365 = vmatprep.subr.mxu0 0.0
          %366 = vmatpush2.msra.mxu0 0.0
          %367 = vmatprep.subr.mxu0 0.0
          %368 = vmatpush2.msra.mxu0 0.0
          %369 = vmatprep.subr.mxu0 0.0
          %370 = vmatpush2.msra.mxu0 0.0
          %371 = vmatprep.subr.mxu0 0.0
          %372 = vmatpush2.msra.mxu0 0.0
          %373 = vmatprep.subr.mxu0 0.0
          %374 = vmatpush2.msra.mxu0 0.0
          %375 = vmatprep.subr.mxu0 0.0
          %376 = vmatpush2.msra.mxu0 0.0
          %377 = vmatprep.subr.mxu0 0.0
          %378 = vmatpush2.msra.mxu0 0.0
          %379 = vmatprep.subr.mxu0 0.0
          %380 = vmatpush2.msra.mxu0 0.0
          %381 = vmatprep.subr.mxu0 0.0
          %382 = vmatpush2.msra.mxu0 0.0
          %383 = vmatprep.subr.mxu0 0.0
          %384 = vmatpush2.msra.mxu0 0.0
          %385 = vmatprep.mubr.f32.mxu0 0.0
          %386 = vmatmul.mubr.f32.gmra.mxu0 %v319
          %v387 = vpop.f32.mrf.mxu0
          %v388 = vadd.f32 %v316, %v387
          %v389 = vpop.f32.mrf.mxu0
          %390 = vdwg.mxu0
          %v391 = vmax.f32 %v388, 0.0
          %v392 = vld [vmem:[%s3] sm:$0xff]
          %v393 = vld [vmem:[%s3 + $0x8] sm:$0xff]
          %v394 = vld [vmem:[%s3 + $0x10] sm:$0xff]
          %v395 = vld [vmem:[%s3 + $0x18] sm:$0xff]
          %v396 = vld [vmem:[%s4] sm:$0xff]
          %v397 = vld [vmem:[%s4 + $0x8] sm:$0xff]
          %v398 = vld [vmem:[%s4 + $0x10] sm:$0xff]
          %v399 = vld [vmem:[%s4 + $0x18] sm:$0xff]
          %vm400 = vcmask 64512
          %v402 = vsel %vm400, %v392, 0
          %v405 = vsel %vm400, %v393, 0
          %v408 = vsel %vm400, %v394, 0
          %v411 = vsel %vm400, %v395, 0
          %413 = vmatprep.subr.mxu0 0.0
          %414 = vmatpush1.msra.mxu0 0.0
          %415 = vmatprep.subr.mxu0 0.0
          %416 = vmatpush1.msra.mxu0 0.0
          %417 = vmatprep.subr.mxu0 0.0
          %418 = vmatpush1.msra.mxu0 0.0
          %419 = vmatprep.subr.mxu0 0.0
          %420 = vmatpush1.msra.mxu0 0.0
          %421 = vmatprep.subr.mxu0 0.0
          %422 = vmatpush1.msra.mxu0 0.0
          %423 = vmatprep.subr.mxu0 0.0
          %424 = vmatpush1.msra.mxu0 0.0
          %425 = vmatprep.subr.mxu0 0.0
          %426 = vmatpush1.msra.mxu0 0.0
          %427 = vmatprep.subr.mxu0 0.0
          %428 = vmatpush1.msra.mxu0 0.0
          %429 = vmatprep.subr.mxu0 0.0
          %430 = vmatpush1.msra.mxu0 0.0
          %431 = vmatprep.subr.mxu0 0.0
          %432 = vmatpush1.msra.mxu0 0.0
          %433 = vmatprep.subr.mxu0 0.0
          %434 = vmatpush1.msra.mxu0 0.0
          %435 = vmatprep.subr.mxu0 0.0
          %436 = vmatpush1.msra.mxu0 0.0
          %437 = vmatprep.subr.mxu0 0.0
          %438 = vmatpush1.msra.mxu0 0.0
          %439 = vmatprep.subr.mxu0 0.0
          %440 = vmatpush1.msra.mxu0 0.0
          %441 = vmatprep.subr.mxu0 0.0
          %442 = vmatpush1.msra.mxu0 0.0
          %443 = vmatprep.subr.mxu0 0.0
          %444 = vmatpush1.msra.mxu0 %v391
          %445 = vmatprep.subr.mxu0 0.0
          %446 = vmatpush2.msra.mxu0 0.0
          %447 = vmatprep.subr.mxu0 0.0
          %448 = vmatpush2.msra.mxu0 0.0
          %449 = vmatprep.subr.mxu0 0.0
          %450 = vmatpush2.msra.mxu0 0.0
          %451 = vmatprep.subr.mxu0 0.0
          %452 = vmatpush2.msra.mxu0 0.0
          %453 = vmatprep.subr.mxu0 0.0
          %454 = vmatpush2.msra.mxu0 0.0
          %455 = vmatprep.subr.mxu0 0.0
          %456 = vmatpush2.msra.mxu0 0.0
          %457 = vmatprep.subr.mxu0 0.0
          %458 = vmatpush2.msra.mxu0 0.0
          %459 = vmatprep.subr.mxu0 0.0
          %460 = vmatpush2.msra.mxu0 0.0
          %461 = vmatprep.subr.mxu0 0.0
          %462 = vmatpush2.msra.mxu0 0.0
          %463 = vmatprep.subr.mxu0 0.0
          %464 = vmatpush2.msra.mxu0 0.0
          %465 = vmatprep.subr.mxu0 0.0
          %466 = vmatpush2.msra.mxu0 0.0
          %467 = vmatprep.subr.mxu0 0.0
          %468 = vmatpush2.msra.mxu0 0.0
          %469 = vmatprep.subr.mxu0 0.0
          %470 = vmatpush2.msra.mxu0 0.0
          %471 = vmatprep.subr.mxu0 0.0
          %472 = vmatpush2.msra.mxu0 0.0
          %473 = vmatprep.subr.mxu0 0.0
          %474 = vmatpush2.msra.mxu0 0.0
          %475 = vmatprep.subr.mxu0 0.0
          %476 = vmatpush2.msra.mxu0 0.0
          %477 = vmatprep.mubr.f32.mxu0 0.0
          %478 = vmatmul.mubr.f32.gmra.mxu0 %v402
          %v479 = vpop.f32.mrf.mxu0
          %v480 = vadd.f32 %v396, %v479
          %v481 = vpop.f32.mrf.mxu0
          %482 = vmatprep.mubr.f32.mxu0 0.0
          %483 = vmatmul.mubr.f32.gmra.mxu0 %v405
          %v484 = vpop.f32.mrf.mxu0
          %v485 = vadd.f32 %v397, %v484
          %v486 = vpop.f32.mrf.mxu0
          %487 = vmatprep.mubr.f32.mxu0 0.0
          %488 = vmatmul.mubr.f32.gmra.mxu0 %v408
          %v489 = vpop.f32.mrf.mxu0
          %v490 = vadd.f32 %v398, %v489
          %v491 = vpop.f32.mrf.mxu0
          %492 = vmatprep.mubr.f32.mxu0 0.0
          %493 = vmatmul.mubr.f32.gmra.mxu0 %v411
          %v494 = vpop.f32.mrf.mxu0
          %v495 = vadd.f32 %v399, %v494
          %v496 = vpop.f32.mrf.mxu0
          %497 = vdwg.mxu0
          %v498 = vxor.u32 %v480, 2147483648
          %v499 = vxor.u32 %v485, 2147483648
          %v500 = vxor.u32 %v490, 2147483648
          %v501 = vxor.u32 %v495, 2147483648
          %v502 = vmul.f32 %v498, 1.442695
          %v503 = vpow.pop %v502
          %v504 = vmul.f32 %v499, 1.442695
          %v505 = vpow.pop %v504
          %v506 = vmul.f32 %v500, 1.442695
          %v507 = vpow.pop %v506
          %v508 = vmul.f32 %v501, 1.442695
          %v509 = vpow.pop %v508
          %v510 = vadd.f32 %v503, 1.0
          %v511 = vadd.f32 %v505, 1.0
          %v512 = vadd.f32 %v507, 1.0
          %v513 = vadd.f32 %v509, 1.0
          %v514 = vrcp.pop %v510
          %v515 = vmul.f32 1.0, %v514
          %v516 = vrcp.pop %v511
          %v517 = vmul.f32 1.0, %v516
          %v518 = vrcp.pop %v512
          %v519 = vmul.f32 1.0, %v518
          %v520 = vrcp.pop %v513
          %v521 = vmul.f32 1.0, %v520
          loop: start=0, step=1, limit=2
          $region53: #{tpu_custom_call.1} parent=51 // loop_pre_header
            _
          $region54: #{tpu_custom_call.1} parent=51 // loop_header
            %s523 = sphi 0, %s527
            %p524 = scmp.ge.s32.totalorder %s523, 2
          $region55: #{tpu_custom_call.1} parent=51 // loop_header_branch
            %526 = sbr.rel (%p524) target = $region59
          $region56: #{tpu_custom_call.1} parent=51 // loop_body
            %s528 = smul.u32 %s523, 128
            %s529 = sshra.s32 %s528, 7
            %s530 = sand.u32 %s528, 127
            %s531 = smul.addr %s529, 8
            %s532 = scalar_lea.vmem %s257, %s531 [#allocation6]
            %v533 = vld [vmem:[%s532] sm:$0xff]
            %v534 = vld [vmem:[%s532 + $0x10] sm:$0xff]
            %v535 = vld [vmem:[%s532 + $0x20] sm:$0xff]
            %v536 = vld [vmem:[%s532 + $0x30] sm:$0xff]
            %538 = vset.pattern.permute.xlu0 0
            %539 = vperm.xlu0 %538, %v515
            %v540 = vpop.permute.xlu0 %539
            %543 = vset.pattern.permute.xlu0 0
            %544 = vperm.xlu0 %543, %v517
            %v545 = vpop.permute.xlu0 %544
            %548 = vset.pattern.permute.xlu0 0
            %549 = vperm.xlu0 %548, %v519
            %v550 = vpop.permute.xlu0 %549
            %553 = vset.pattern.permute.xlu0 0
            %554 = vperm.xlu0 %553, %v521
            %v555 = vpop.permute.xlu0 %554
            %v557 = vmul.f32 %v533, %v540
            %v558 = vmul.f32 %v534, %v545
            %v559 = vmul.f32 %v535, %v550
            %v560 = vmul.f32 %v536, %v555
            %561 = vst [vmem:[%s532] sm:$0xff] %v557
            %562 = vst [vmem:[%s532 + $0x10] sm:$0xff] %v558
            %563 = vst [vmem:[%s532 + $0x20] sm:$0xff] %v559
            %564 = vst [vmem:[%s532 + $0x30] sm:$0xff] %v560
          $region57: #{tpu_custom_call.1} parent=51 // loop_footer
            %s527 = sadd.s32 1, %s523
          $region58: #{tpu_custom_call.1} parent=51 // loop_footer_branch
            %522 = sbr.rel target = $region54
          $region59: #{tpu_custom_call.1} parent=51 // loop_exit
            _
        $region52: #{tpu_custom_call.1} parent=39 // pred_fallthru
          _
        %s565 = sand.u32 %s154, 1
        %s566 = scalar_lea.sflag [#allocation5], %s565
        %s567 = sand.u32 %s154, 1
        %s568 = smul.addr %s567, 64
        %s569 = scalar_lea.vmem [#allocation6], %s568
        // Predicated region
        $region60: #{tpu_custom_call.1} parent=39 // pred_check
          %p570 = pneg %p164
        $region61: #{tpu_custom_call.1} parent=39 // pred_check_branch
          %572 = sbr.rel (%p570) target = $region63
        $region62: #{tpu_custom_call.1} parent=39 // pred_region
          %s574 = ssub.s32 1024, 1024
          %575 = vsyncadd %s566, %s574
          %s576 = smul.addr %s26, 8
          %s577 = smul.addr %s576, 128
          %s578 = scalar_lea.hbm %s5, %s577
          %s579 = sshll.u32 %s569, 4
          %s580 = int_to_ptr.vmem [resolvable:$true] %s579
          %585 = dma.vmem_to_hbm [thread:$0]  %s580, 1024, %s578, %s566, 256, 256, 16
        $region63: #{tpu_custom_call.1} parent=39 // pred_fallthru
          _
      $region40: #{tpu_custom_call.1} parent=5 // pred_fallthru
        _
      %p586 = scmp.le.s32.totalorder 2, %s17
      // Predicated region
      $region64: #{tpu_custom_call.1} parent=5 // pred_check
        %p587 = pneg %p586
      $region65: #{tpu_custom_call.1} parent=5 // pred_check_branch
        %589 = sbr.rel (%p587) target = $region67
      $region66: #{tpu_custom_call.1} parent=5 // pred_region
        %s590 = ssub.s32 %s17, 2
        // Predicated region
        $region68: #{tpu_custom_call.1} parent=66 // pred_check
          %p591 = pneg %p170
        $region69: #{tpu_custom_call.1} parent=66 // pred_check_branch
          %593 = sbr.rel (%p591) target = $region71
        $region70: #{tpu_custom_call.1} parent=66 // pred_region
          %s594 = sand.u32 %s155, 1
          %s595 = scalar_lea.sflag [#allocation5], %s594
          %s596 = sand.u32 %s155, 1
          %s597 = smul.addr %s596, 64
          %s598 = scalar_lea.vmem [#allocation6], %s597
          %599 = dma.done %s595, 1024
        $region71: #{tpu_custom_call.1} parent=66 // pred_fallthru
          _
      $region67: #{tpu_custom_call.1} parent=5 // pred_fallthru
        _
    $region6: #{tpu_custom_call.1} parent=1 // loop_footer
      %s21 = sadd.s32 1, %s17
    $region7: #{tpu_custom_call.1} parent=1 // loop_footer_branch
      %16 = sbr.rel target = $region3
    $region8: #{tpu_custom_call.1} parent=1 // loop_exit
      _
    %600 = vsyncpa [#allocation4], 1
    %s601 = scalar_lea.sflag [#allocation4], 1
    %602 = vsyncpa %s601, 1
    %603 = vsyncpa [#allocation5], 1
    %s604 = scalar_lea.sflag [#allocation5], 1
    %605 = vsyncpa %s604, 1

</llo_original>
